<compile_context>
chip_gen: v6e
topology: v6e:2x2x1
jax: 0.10.0
libtpu: 0.0.40
codegen_flags: <defaults>
</compile_context>

<pallas_src>
import functools

import jax
import jax.numpy as jnp
from jax import lax
from jax.experimental import pallas as pl
from jax.experimental.pallas import tpu as pltpu


def _round_up(n, m):
    return ((n + m - 1) // m) * m


def _largest_aligned_divisor(n, quantum, cap):
    """Largest multiple of `quantum` that divides n and is <= cap (n % quantum == 0)."""
    c = min(cap, n)
    c -= c % quantum
    while c >= quantum:
        if n % c == 0:
            return c
        c -= quantum
    return quantum


def _causal_avg_kernel(x_ref, tri_ref, y_ref, carry_ref, *, block_l):
    """One (batch, d-block, time-block) step of causal average pooling.

    x_ref:     (block_l, block_d)   input time tile
    tri_ref:   (block_l, block_l)   lower-triangular ones (VMEM-resident, constant)
    y_ref:     (block_l, block_d)   output time tile
    carry_ref: (1, block_d) f32     running sum of all timesteps before this block
    """
    t = pl.program_id(2)

    # Reset the running-sum carry at the start of each (batch, d-block)'s time loop.
    @pl.when(t == 0)
    def _():
        carry_ref[...] = jnp.zeros_like(carry_ref)

    tri = tri_ref[...]                          # resident; bf16 when x is bf16, else f32
    x = x_ref[...].astype(tri.dtype)            # no-op for bf16/f32 inputs

    # Block-local cumulative sum as a single MXU matmul with f32 accumulation.
    cs = jnp.dot(tri, x, preferred_element_type=jnp.float32)

    # Add the carried prefix sum from previous time blocks (full f32 precision).
    total = cs + carry_ref[...]                 # (block_l, block_d) f32

    # Divide by the (1-based) global timestep: column reciprocal on the EUP slot
    # plus one VPU multiply over the tile (instead of a full-tile divide).
    tstart = t * block_l
    idx = lax.broadcasted_iota(jnp.int32, (block_l, 1), 0) + tstart + 1
    inv = pl.reciprocal(idx.astype(jnp.float32), approx=True)
    y_ref[...] = (total * inv).astype(y_ref.dtype)

    # Carry = cumulative sum at this block's last timestep.
    carry_ref[...] = total[block_l - 1:block_l, :]


def causal_average_pooling(x, *, block_l=None, block_d=None):
    """x: (B, L, D) -> (B, L, D) causal (running) average along the time axis."""
    B, L, D = x.shape
    out_dtype = x.dtype

    # Pad the lane axis (D) to a multiple of 128 so every store is a full unmasked vst.
    Dp = _round_up(D, 128)

    # Pick / pad the time tiling: block_l is always a multiple of 8, capped at 128
    # (keeps the f32 tri-matmul under the HBM roofline on v5e and bounds tri to 64 KiB).
    if block_l is None:
        if L <= 128:
            Lp = _round_up(L, 8)
            block_l = Lp
        else:
            Lp = _round_up(L, 128)
            block_l = 128
    else:
        Lp = _round_up(L, block_l)

    if block_d is None:
        block_d = _largest_aligned_divisor(Dp, 128, 1024)
    assert Lp % block_l == 0 and Dp % block_d == 0 and block_d % 128 == 0

    if (Lp, Dp) != (L, D):
        # Zero padding is causal-safe: padded rows never feed earlier rows, padded
        # columns are independent; both are sliced off below.
        x = jnp.pad(x, ((0, 0), (0, Lp - L), (0, Dp - D)))

    n_t = Lp // block_l
    n_d = Dp // block_d

    # Triangular cumsum operator, built ONCE and kept VMEM-resident via a constant
    # index_map.  bf16 operands are exact here (tri is {0,1}) and take the fast MXU
    # path when x is bf16; keep f32 operands for f32 inputs to match the reference.
    compute_dtype = jnp.bfloat16 if x.dtype == jnp.bfloat16 else jnp.float32
    row = lax.broadcasted_iota(jnp.int32, (block_l, block_l), 0)
    col = lax.broadcasted_iota(jnp.int32, (block_l, block_l), 1)
    tri = (row >= col).astype(compute_dtype)

    kernel = functools.partial(_causal_avg_kernel, block_l=block_l)
    y = pl.pallas_call(
        kernel,
        out_shape=jax.ShapeDtypeStruct((B, Lp, Dp), out_dtype),
        grid_spec=pltpu.PrefetchScalarGridSpec(
            num_scalar_prefetch=0,
            grid=(B, n_d, n_t),  # time innermost = carried axis
            in_specs=[
                pl.BlockSpec((None, block_l, block_d), lambda b, d, t: (b, t, d)),
                # Constant block index -> DMA'd once, stays resident across the grid.
                pl.BlockSpec((block_l, block_l), lambda b, d, t: (0, 0)),
            ],
            out_specs=pl.BlockSpec((None, block_l, block_d), lambda b, d, t: (b, t, d)),
            scratch_shapes=[pltpu.VMEM((1, block_d), jnp.float32)],
        ),
        compiler_params=pltpu.CompilerParams(
            dimension_semantics=("parallel", "parallel", "arbitrary"),
            # Per-step footprint (double-buffered in+out tiles + resident tri + carry)
            # is < 5 MiB at the default caps; 32 MiB leaves ample headroom on all gens.
            vmem_limit_bytes=32 * 1024 * 1024,
        ),
    )(x, tri)

    if (Lp, Dp) != (L, D):
        y = y[:, :L, :D]
    return y


def causal_average_pooling_reference(x):
    B, L, D = x.shape
    denom = jnp.arange(1, L + 1, dtype=jnp.float32)[None, :, None]
    return jnp.cumsum(x.astype(jnp.float32), axis=1) / denom


if __name__ == "__main__":
    # Primary check: small shapes implied by the module's (B, L, D) forward.
    B, L, D = 2, 16, 32
    x = jax.random.normal(jax.random.PRNGKey(0), (B, L, D), dtype=jnp.float32)
    y = jax.block_until_ready(causal_average_pooling(x))
    assert y.shape == (B, L, D)
    y_ref = causal_average_pooling_reference(x)
    max_err = float(jnp.max(jnp.abs(y.astype(jnp.float32) - y_ref)))
    if max_err > 2e-3:
        raise AssertionError(f"Pallas kernel mismatch (small case), max_err={max_err}")

    # Secondary check: exercises L/D padding, D tiling, and the multi-block time carry.
    B2, L2, D2 = 2, 192, 160
    x2 = jax.random.normal(jax.random.PRNGKey(1), (B2, L2, D2), dtype=jnp.float32)
    y2 = jax.block_until_ready(causal_average_pooling(x2))
    y2_ref = causal_average_pooling_reference(x2)
    max_err2 = float(jnp.max(jnp.abs(y2.astype(jnp.float32) - y2_ref)))
    if max_err2 > 2e-3:
        raise AssertionError(f"Pallas kernel mismatch (tiled case), max_err={max_err2}")

    print("KERNEL_OK")
</pallas_src>

<mosaic_0001>
module attributes {stable_mosaic.version = 11 : i64} {
  func.func @_causal_avg_kernel(%arg0: i32, %arg1: i32, %arg2: i32, %arg3: memref<1x16x128xf32, #tpu.memory_space<vmem>>, %arg4: memref<16x16xf32, #tpu.memory_space<vmem>>, %arg5: memref<1x16x128xf32, #tpu.memory_space<vmem>>, %arg6: memref<1x128xf32, #tpu.memory_space<vmem>>) attributes {dimension_semantics = [#tpu.dimension_semantics<parallel>, #tpu.dimension_semantics<parallel>, #tpu.dimension_semantics<arbitrary>], iteration_bounds = array<i64: 2, 1, 1>, scalar_prefetch = 0 : i64, scratch_operands = 1 : i64, tpu.core_type = #tpu.core_type<tc>, window_params = [{transform_indices = @transform_0, window_bounds = array<i64: 1, 16, 128>}, {pipeline_mode = #tpu.pipeline_mode<synchronous>, transform_indices = @transform_1, window_bounds = array<i64: 16, 16>}, {transform_indices = @transform_2, window_bounds = array<i64: 1, 16, 128>}]} {
    %c0_i32 = arith.constant 0 : i32
    %0 = arith.cmpi eq, %arg2, %c0_i32 : i32
    %1 = arith.extui %0 : i1 to i32
    %c0_i32_0 = arith.constant 0 : i32
    %2 = arith.cmpi ne, %1, %c0_i32_0 : i32
    scf.if %2 {
      %cst_12 = arith.constant 0.000000e+00 : f32
      %25 = vector.broadcast %cst_12 : f32 to vector<1x128xf32>
      %c0_13 = arith.constant 0 : index
      %c0_14 = arith.constant 0 : index
      %26 = vector.load %arg6[%c0_13, %c0_14] : memref<1x128xf32, #tpu.memory_space<vmem>>, vector<1x128xf32>
      tpu.vector_store %arg6[%c0_13, %c0_14], %25 {strides = array<i32>} : memref<1x128xf32, #tpu.memory_space<vmem>>, vector<1x128xf32>,
    } else {
    }
    %c0 = arith.constant 0 : index
    %c0_1 = arith.constant 0 : index
    %3 = vector.load %arg4[%c0, %c0_1] : memref<16x16xf32, #tpu.memory_space<vmem>>, vector<16x16xf32>
    %c0_2 = arith.constant 0 : index
    %c0_3 = arith.constant 0 : index
    %c0_4 = arith.constant 0 : index
    %4 = vector.load %arg3[%c0_2, %c0_3, %c0_4] : memref<1x16x128xf32, #tpu.memory_space<vmem>>, vector<1x16x128xf32>
    %5 = vector.shape_cast %4 : vector<1x16x128xf32> to vector<16x128xf32>
    %cst = arith.constant dense<0.000000e+00> : vector<16x128xf32>
    %6 = tpu.matmul %3, %5, %cst {dimension_numbers = #tpu.dot_dimension_numbers<[1], [0], [0], [1], [0, 0, 1, 1], [], []>} : vector<16x16xf32>, vector<16x128xf32>, vector<16x128xf32> -> vector<16x128xf32>
    %c0_5 = arith.constant 0 : index
    %c0_6 = arith.constant 0 : index
    %7 = vector.load %arg6[%c0_5, %c0_6] : memref<1x128xf32, #tpu.memory_space<vmem>>, vector<1x128xf32>
    %8 = vector.broadcast %7 : vector<1x128xf32> to vector<16x128xf32>
    %9 = arith.addf %6, %8 : vector<16x128xf32>
    %c16_i32 = arith.constant 16 : i32
    %10 = arith.muli %arg2, %c16_i32 : i32
    %11 = tpu.iota {dimensions = array<i32: 0>} : vector<16x1xi32>
    %12 = vector.broadcast %10 : i32 to vector<16x1xi32>
    %13 = arith.addi %11, %12 : vector<16x1xi32>
    %c1_i32 = arith.constant 1 : i32
    %14 = vector.broadcast %c1_i32 : i32 to vector<16x1xi32>
    %15 = arith.addi %13, %14 : vector<16x1xi32>
    %16 = arith.sitofp %15 : vector<16x1xi32> to vector<16x1xf32>
    %17 = tpu.reciprocal %16 {approx = true} : vector<16x1xf32> -> vector<16x1xf32>
    %18 = vector.broadcast %17 : vector<16x1xf32> to vector<16x128xf32>
    %19 = arith.mulf %9, %18 : vector<16x128xf32>
    %c0_7 = arith.constant 0 : index
    %c0_8 = arith.constant 0 : index
    %c0_9 = arith.constant 0 : index
    %20 = vector.load %arg5[%c0_7, %c0_8, %c0_9] : memref<1x16x128xf32, #tpu.memory_space<vmem>>, vector<1x16x128xf32>
    %21 = vector.shape_cast %20 : vector<1x16x128xf32> to vector<16x128xf32>
    %22 = vector.shape_cast %19 : vector<16x128xf32> to vector<1x16x128xf32>
    tpu.vector_store %arg5[%c0_7, %c0_8, %c0_9], %22 {strides = array<i32>} : memref<1x16x128xf32, #tpu.memory_space<vmem>>, vector<1x16x128xf32>,
    %23 = vector.extract_strided_slice %9 {offsets = [15, 0], sizes = [1, 128], strides = [1, 1]} : vector<16x128xf32> to vector<1x128xf32>
    %c0_10 = arith.constant 0 : index
    %c0_11 = arith.constant 0 : index
    %24 = vector.load %arg6[%c0_10, %c0_11] : memref<1x128xf32, #tpu.memory_space<vmem>>, vector<1x128xf32>
    tpu.vector_store %arg6[%c0_10, %c0_11], %23 {strides = array<i32>} : memref<1x128xf32, #tpu.memory_space<vmem>>, vector<1x128xf32>,
    return
  }
  func.func @transform_0(%arg0: i32, %arg1: i32, %arg2: i32) -> (i32, i32, i32) {
    %c0_i32 = arith.constant 0 : i32
    return %arg0, %arg2, %arg1 : i32, i32, i32
  }
  func.func @transform_1(%arg0: i32, %arg1: i32, %arg2: i32) -> (i32, i32) {
    %c0_i32 = arith.constant 0 : i32
    %c0_i32_0 = arith.constant 0 : i32
    %c0_i32_1 = arith.constant 0 : i32
    return %c0_i32, %c0_i32_0 : i32, i32
  }
  func.func @transform_2(%arg0: i32, %arg1: i32, %arg2: i32) -> (i32, i32, i32) {
    %c0_i32 = arith.constant 0 : i32
    return %arg0, %arg2, %arg1 : i32, i32, i32
  }
}

</mosaic_0001>

<llo_original>
// kernel: tpu_custom_call.1
$region0: #{tpu_custom_call.1}
  #allocation0 [shape = 'u32[]', space=smem, size = 0x4, offset = 0x4, fixed_abs, tag = 'smem constant byte address 0x4 - core index']
  #allocation1 [shape = 'u32[144,128]{1,0:T(1,128)}', space=vmem, size = 0x12000, scoped, tag = 'internal scratch']
  #allocation2 [shape = 'f32[1,128]{1,0:T(1,128)}', space=vmem, size = 0x200, scoped, tag = 'scratch operand']
  %s0 = inlined_call_operand.hbm [shape: f32[2,16,128], index: 0, kind: input, shape index: {}]
  %s1 = inlined_call_operand.hbm [shape: f32[16,16], index: 1, kind: input, shape index: {}]
  %s2 = inlined_call_operand.hbm [shape: f32[2,16,128], index: 2, kind: output, shape index: {}]
  %s3 = sld [smem:[#allocation0]]
  $region53: #{tpu_custom_call.1} parent=0
    _
  %s5 = ssub.s32 1, %s3
  %s6 = scalar_select 0, %s5, %s3
  $region1: #{tpu_custom_call.1} parent=0
    #allocation3 [shape = 'u8[16384]{0}', space=vmem, size = 0x4000, scoped, tag = 'input window, operand 0']
    #allocation4 [shape = 's32[2]{0}', space=sflag, size = 0x8, scoped, tag = 'scoped memory for tpu_custom_call.1']
    #allocation5 [shape = 's32[2]{0}', space=sflag, size = 0x8, scoped, tag = 'scoped memory for tpu_custom_call.1']
    #allocation6 [shape = 'u8[8192]{0}', space=vmem, size = 0x2000, scoped, tag = 'input window, operand 1, single buffered']
    #allocation7 [shape = 's32[1]{0}', space=sflag, size = 0x4, scoped, tag = 'scoped memory for tpu_custom_call.1']
    #allocation8 [shape = 'u8[16384]{0}', space=vmem, size = 0x4000, scoped, tag = 'output window, operand 0']
    %7 = vsyncpa [#allocation4], 0
    %s8 = scalar_lea.sflag [#allocation4], 1
    %9 = vsyncpa %s8, 0
    %10 = vsyncpa [#allocation7], 0
    %11 = vsyncpa [#allocation5], 0
    %s12 = scalar_lea.sflag [#allocation5], 1
    %13 = vsyncpa %s12, 0
    loop: start=0, step=1, limit=4
    $region2: #{tpu_custom_call.1} parent=1 // loop_pre_header
      _
    $region3: #{tpu_custom_call.1} parent=1 // loop_header
      %s15 = sphi 0, %s19
      %p16 = scmp.ge.s32.totalorder %s15, 4
      %s22 = sphi 0, %s41
      %s23 = sphi 0, %s37
      %s24 = sphi 0, %s33
      %s25 = sphi 0, %s22
      %s26 = sphi 0, %s23
      %s27 = sphi 0, %s24
      %s28 = sphi 0, %s25
      %s29 = sphi 0, %s26
      %s30 = sphi 0, %s27
      %s48 = sphi 0, %s50
      %s51 = sphi 0, %s48
      %s52 = sphi 0, %s51
      %s68 = sphi 0, %s52
      %s72 = sphi 0, %s72
      %s74 = sphi 0, %s72
      %s75 = sphi 0, %s74
      %s89 = sphi 0, %s75
      %s99 = sphi 0, %s101
      %s102 = sphi 0, %s99
      %s103 = sphi 0, %s102
      %s119 = sphi 0, %s103
    $region4: #{tpu_custom_call.1} parent=1 // loop_header_branch
      %18 = sbr.rel (%p16) target = $region8
    $region5: #{tpu_custom_call.1} parent=1 // loop_body
      %s20 = ssub.s32 %s15, 1
      %s21 = ssub.s32 %s15, 2
      %s31 = sadd.s32 1, %s24
      %p32 = scmp.ge.s32.totalorder %s31, 1
      %s33 = scalar_select %p32, 0, %s31
      %s34 = sadd.s32 1, %s23
      %s35 = scalar_select %p32, %s34, %s23
      %p36 = scmp.ge.s32.totalorder %s35, 1
      %s37 = scalar_select %p36, 0, %s35
      %s38 = sadd.s32 1, %s22
      %s39 = scalar_select %p36, %s38, %s22
      %p40 = scmp.ge.s32.totalorder %s39, 2
      %s41 = scalar_select %p40, 0, %s39
      %s42 = ssub.s32 %s22, %s41
      %s43 = ssub.s32 %s24, %s33
      %s44 = sor.u32 %s42, %s43
      %s45 = ssub.s32 %s23, %s37
      %s46 = sor.u32 %s44, %s45
      %p47 = scmp.eq.s32.totalorder %s46, 0
      %s49 = sadd.s32 %s48, 1
      %s50 = scalar_select %p47, %s48, %s49
      %p53 = pneg %p47
      %p54 = scmp.eq.s32.totalorder %s15, 1
      %p55 = por %p53, %p54
      %p56 = scmp.ne.s32.totalorder %s48, %s51
      %p57 = scmp.eq.s32.totalorder %s15, 0
      %p58 = por %p56, %p57
      %p59 = scmp.ne.s32.totalorder %s48, %s51
      %p60 = scmp.eq.s32.totalorder %s20, 1
      %p61 = por %p59, %p60
      %p62 = scmp.ne.s32.totalorder %s51, %s52
      %p63 = scmp.eq.s32.totalorder %s20, 0
      %p64 = por %p62, %p63
      %p65 = scmp.ne.s32.totalorder %s51, %s52
      %p66 = scmp.eq.s32.totalorder %s21, 1
      %p67 = por %p65, %p66
      %p69 = scmp.ne.s32.totalorder %s52, %s68
      %p70 = scmp.eq.s32.totalorder %s21, 0
      %p71 = por %p69, %p70
      %s73 = sadd.s32 %s72, 1
      %p76 = scmp.eq.s32.totalorder %s15, 1
      %p77 = scmp.ne.s32.totalorder %s72, %s74
      %p78 = scmp.eq.s32.totalorder %s15, 0
      %p79 = por %p77, %p78
      %p80 = scmp.ne.s32.totalorder %s72, %s74
      %p81 = scmp.eq.s32.totalorder %s20, 1
      %p82 = por %p80, %p81
      %p83 = scmp.ne.s32.totalorder %s74, %s75
      %p84 = scmp.eq.s32.totalorder %s20, 0
      %p85 = por %p83, %p84
      %p86 = scmp.ne.s32.totalorder %s74, %s75
      %p87 = scmp.eq.s32.totalorder %s21, 1
      %p88 = por %p86, %p87
      %p90 = scmp.ne.s32.totalorder %s75, %s89
      %p91 = scmp.eq.s32.totalorder %s21, 0
      %p92 = por %p90, %p91
      %s93 = ssub.s32 %s22, %s41
      %s94 = ssub.s32 %s24, %s33
      %s95 = sor.u32 %s93, %s94
      %s96 = ssub.s32 %s23, %s37
      %s97 = sor.u32 %s95, %s96
      %p98 = scmp.eq.s32.totalorder %s97, 0
      %s100 = sadd.s32 %s99, 1
      %s101 = scalar_select %p98, %s99, %s100
      %p104 = pneg %p98
      %p105 = scmp.eq.s32.totalorder %s15, 1
      %p106 = por %p104, %p105
      %p107 = scmp.ne.s32.totalorder %s99, %s102
      %p108 = scmp.eq.s32.totalorder %s15, 0
      %p109 = por %p107, %p108
      %p110 = scmp.ne.s32.totalorder %s99, %s102
      %p111 = scmp.eq.s32.totalorder %s20, 1
      %p112 = por %p110, %p111
      %p113 = scmp.ne.s32.totalorder %s102, %s103
      %p114 = scmp.eq.s32.totalorder %s20, 0
      %p115 = por %p113, %p114
      %p116 = scmp.ne.s32.totalorder %s102, %s103
      %p117 = scmp.eq.s32.totalorder %s21, 1
      %p118 = por %p116, %p117
      %p120 = scmp.ne.s32.totalorder %s103, %s119
      %p121 = scmp.eq.s32.totalorder %s21, 0
      %p122 = por %p120, %p121
      %p123 = scmp.le.s32.totalorder 1, %s15
      %p124 = scmp.lt.s32.totalorder %s15, 3
      %p125 = pnand %p123, %p124
      %p126 = pneg %p125
      // Predicated region
      $region9: #{tpu_custom_call.1} parent=5 // pred_check
        _
      $region10: #{tpu_custom_call.1} parent=5 // pred_check_branch
        %128 = sbr.rel (%p125) target = $region12
      $region11: #{tpu_custom_call.1} parent=5 // pred_region
        %s129 = ssub.s32 %s15, 1
        // Predicated region
        $region13: #{tpu_custom_call.1} parent=11 // pred_check
          %p130 = pneg %p85
        $region14: #{tpu_custom_call.1} parent=11 // pred_check_branch
          %132 = sbr.rel (%p130) target = $region16
        $region15: #{tpu_custom_call.1} parent=11 // pred_region
          %s134 = ssub.s32 256, 256
          %135 = vsyncadd [#allocation7], %s134
          %s136 = sshll.u32 [#allocation6], 4
          %s137 = int_to_ptr.vmem [resolvable:$true] %s136
          %142 = dma.hbm_to_vmem [thread:$0]  %s1, 256, %s137, [#allocation7], 128, 128, 8
        $region16: #{tpu_custom_call.1} parent=11 // pred_fallthru
          _
      $region12: #{tpu_custom_call.1} parent=5 // pred_fallthru
        _
      %p143 = scmp.lt.s32.totalorder %s15, 2
      // Predicated region
      $region17: #{tpu_custom_call.1} parent=5 // pred_check
        %p144 = pneg %p143
      $region18: #{tpu_custom_call.1} parent=5 // pred_check_branch
        %146 = sbr.rel (%p144) target = $region20
      $region19: #{tpu_custom_call.1} parent=5 // pred_region
        // Predicated region
        $region21: #{tpu_custom_call.1} parent=19 // pred_check
          %p147 = pneg %p58
        $region22: #{tpu_custom_call.1} parent=19 // pred_check_branch
          %149 = sbr.rel (%p147) target = $region24
        $region23: #{tpu_custom_call.1} parent=19 // pred_region
          %s150 = sand.u32 %s48, 1
          %s151 = scalar_lea.sflag [#allocation4], %s150
          %s152 = sand.u32 %s48, 1
          %s153 = smul.addr %s152, 16
          %s154 = scalar_lea.vmem [#allocation3], %s153
          %s155 = smul.u32 2, %s24
          %s157 = ssub.s32 256, 256
          %158 = vsyncadd %s151, %s157
          %s159 = sadd.s32 %s23, %s155
          %s160 = smul.addr %s22, 2
          %s161 = sadd.s32 %s159, %s160
          %s162 = smul.addr %s161, 128
          %s163 = scalar_lea.hbm %s0, %s162
          %s164 = sshll.u32 %s154, 4
          %s165 = int_to_ptr.vmem [resolvable:$true] %s164
          %170 = dma.hbm_to_vmem [thread:$0]  %s163, 256, %s165, %s151, 128, 128, 8
        $region24: #{tpu_custom_call.1} parent=19 // pred_fallthru
          _
      $region20: #{tpu_custom_call.1} parent=5 // pred_fallthru
        _
      %p171 = scmp.le.s32.totalorder 1, %s15
      %p172 = scmp.lt.s32.totalorder %s15, 3
      %p173 = pnand %p171, %p172
      %p174 = pneg %p173
      // Predicated region
      $region25: #{tpu_custom_call.1} parent=5 // pred_check
        _
      $region26: #{tpu_custom_call.1} parent=5 // pred_check_branch
        %176 = sbr.rel (%p173) target = $region28
      $region27: #{tpu_custom_call.1} parent=5 // pred_region
        %s177 = ssub.s32 %s15, 1
        %s178 = sand.u32 %s51, 1
        %s179 = scalar_lea.sflag [#allocation4], %s178
        %s180 = sand.u32 %s51, 1
        %s181 = smul.addr %s180, 16
        %s182 = scalar_lea.vmem [#allocation3], %s181
        // Predicated region
        $region29: #{tpu_custom_call.1} parent=27 // pred_check
          %p183 = pneg %p64
        $region30: #{tpu_custom_call.1} parent=27 // pred_check_branch
          %185 = sbr.rel (%p183) target = $region32
        $region31: #{tpu_custom_call.1} parent=27 // pred_region
          %186 = dma.done %s179, 256
        $region32: #{tpu_custom_call.1} parent=27 // pred_fallthru
          _
        // Predicated region
        $region33: #{tpu_custom_call.1} parent=27 // pred_check
          %p187 = pneg %p85
        $region34: #{tpu_custom_call.1} parent=27 // pred_check_branch
          %189 = sbr.rel (%p187) target = $region36
        $region35: #{tpu_custom_call.1} parent=27 // pred_region
          %190 = dma.done [#allocation7], 256
        $region36: #{tpu_custom_call.1} parent=27 // pred_fallthru
          _
        %s191 = sand.u32 %s51, 1
        %s192 = scalar_lea.sflag [#allocation4], %s191
        %s193 = sand.u32 %s51, 1
        %s194 = smul.addr %s193, 16
        %s195 = scalar_lea.vmem [#allocation3], %s194
        %p196 = pneg %p64
        %p197 = pneg %p61
        %p198 = pneg %p85
        %p199 = pneg %p82
        %p200 = pneg %p115
        %p201 = pneg %p112
        %s202 = sand.u32 %s102, 1
        %s203 = scalar_lea.sflag [#allocation5], %s202
        %s204 = sand.u32 %s102, 1
        %s205 = smul.addr %s204, 16
        %s206 = scalar_lea.vmem [#allocation8], %s205
        %s207 = smul.u32 2, %s27
        %s208 = smul.u32 2, %s27
        %p209 = scmp.eq.s32.totalorder %s27, 0
        // Predicated region
        $region37: #{tpu_custom_call.1} parent=27 // pred_check
          %p210 = pneg %p209
        $region38: #{tpu_custom_call.1} parent=27 // pred_check_branch
          %212 = sbr.rel (%p210) target = $region40
        $region39: #{tpu_custom_call.1} parent=27 // pred_region
          %213 = vst [vmem:[#allocation2] sm:$0x1] 0.0
        $region40: #{tpu_custom_call.1} parent=27 // pred_fallthru
          _
        %v214 = vld [vmem:[#allocation6] sm:$0xff]
        %v215 = vld [vmem:[#allocation6 + $0x8] sm:$0xff]
        %v216 = vld [vmem:[%s182] sm:$0xff]
        %v217 = vld [vmem:[%s182 + $0x8] sm:$0xff]
        %v218 = vld [vmem:[#allocation2] sm:$0x1]
        %v220 = vlaneseq
        %v221 = vshrl.u32 %v220, 7
        %v222 = vsub.s32 0, %v221
        %v223 = vrot.slane %v218, %v222
        %vm225 = vcmask 130048
        %v227 = vsel %vm225, %v214, 0
        %v230 = vsel %vm225, %v215, 0
        %232 = vmatprep.subr.mxu0 0.0
        %233 = vmatpush1.msra.mxu0 0.0
        %234 = vmatprep.subr.mxu0 0.0
        %235 = vmatpush1.msra.mxu0 0.0
        %236 = vmatprep.subr.mxu0 0.0
        %237 = vmatpush1.msra.mxu0 0.0
        %238 = vmatprep.subr.mxu0 0.0
        %239 = vmatpush1.msra.mxu0 0.0
        %240 = vmatprep.subr.mxu0 0.0
        %241 = vmatpush1.msra.mxu0 0.0
        %242 = vmatprep.subr.mxu0 0.0
        %243 = vmatpush1.msra.mxu0 0.0
        %244 = vmatprep.subr.mxu0 0.0
        %245 = vmatpush1.msra.mxu0 0.0
        %246 = vmatprep.subr.mxu0 0.0
        %247 = vmatpush1.msra.mxu0 0.0
        %248 = vmatprep.subr.mxu0 0.0
        %249 = vmatpush1.msra.mxu0 0.0
        %250 = vmatprep.subr.mxu0 0.0
        %251 = vmatpush1.msra.mxu0 0.0
        %252 = vmatprep.subr.mxu0 0.0
        %253 = vmatpush1.msra.mxu0 0.0
        %254 = vmatprep.subr.mxu0 0.0
        %255 = vmatpush1.msra.mxu0 0.0
        %256 = vmatprep.subr.mxu0 0.0
        %257 = vmatpush1.msra.mxu0 0.0
        %258 = vmatprep.subr.mxu0 0.0
        %259 = vmatpush1.msra.mxu0 0.0
        %260 = vmatprep.subr.mxu0 0.0
        %261 = vmatpush1.msra.mxu0 %v217
        %262 = vmatprep.subr.mxu0 0.0
        %263 = vmatpush1.msra.mxu0 %v216
        %264 = vmatprep.subr.mxu0 0.0
        %265 = vmatpush2.msra.mxu0 0.0
        %266 = vmatprep.subr.mxu0 0.0
        %267 = vmatpush2.msra.mxu0 0.0
        %268 = vmatprep.subr.mxu0 0.0
        %269 = vmatpush2.msra.mxu0 0.0
        %270 = vmatprep.subr.mxu0 0.0
        %271 = vmatpush2.msra.mxu0 0.0
        %272 = vmatprep.subr.mxu0 0.0
        %273 = vmatpush2.msra.mxu0 0.0
        %274 = vmatprep.subr.mxu0 0.0
        %275 = vmatpush2.msra.mxu0 0.0
        %276 = vmatprep.subr.mxu0 0.0
        %277 = vmatpush2.msra.mxu0 0.0
        %278 = vmatprep.subr.mxu0 0.0
        %279 = vmatpush2.msra.mxu0 0.0
        %280 = vmatprep.subr.mxu0 0.0
        %281 = vmatpush2.msra.mxu0 0.0
        %282 = vmatprep.subr.mxu0 0.0
        %283 = vmatpush2.msra.mxu0 0.0
        %284 = vmatprep.subr.mxu0 0.0
        %285 = vmatpush2.msra.mxu0 0.0
        %286 = vmatprep.subr.mxu0 0.0
        %287 = vmatpush2.msra.mxu0 0.0
        %288 = vmatprep.subr.mxu0 0.0
        %289 = vmatpush2.msra.mxu0 0.0
        %290 = vmatprep.subr.mxu0 0.0
        %291 = vmatpush2.msra.mxu0 0.0
        %292 = vmatprep.subr.mxu0 0.0
        %293 = vmatpush2.msra.mxu0 0.0
        %294 = vmatprep.subr.mxu0 0.0
        %295 = vmatpush2.msra.mxu0 0.0
        %296 = vmatprep.mubr.f32.mxu0 0.0
        %297 = vmatmul.mubr.f32.gmra.mxu0 %v227
        %v298 = vpop.f32.mrf.mxu0
        %v299 = vadd.f32 %v223, %v298
        %v300 = vpop.f32.mrf.mxu0
        %301 = vmatprep.mubr.f32.mxu0 0.0
        %302 = vmatmul.mubr.f32.gmra.mxu0 %v230
        %v303 = vpop.f32.mrf.mxu0
        %v304 = vadd.f32 %v223, %v303
        %v305 = vpop.f32.mrf.mxu0
        %306 = vdwg.mxu0
        %s307 = smul.u32 %s27, 16
        %v308 = vlaneseq
        %v309 = vshrl.u32 %v308, 7
        %v310 = vadd.s32 %v309, 8
        %v311 = vstv %s307
        %v312 = vadd.s32 %v309, %v311
        %v313 = vadd.s32 %v310, %v311
        %v314 = vadd.s32 %v312, 1
        %v315 = vadd.s32 %v313, 1
        %v316 = vcvt.s32.f32 %v314
        %v317 = vcvt.s32.f32 %v315
        %v318 = vrcp.pop %v316
        %v319 = vrcp.pop %v317
        %v320 = vmul.f32 %v299, %v318
        %v321 = vmul.f32 %v304, %v319
        %322 = vst [vmem:[%s206] sm:$0xff] %v320
        %323 = vst [vmem:[%s206 + $0x8] sm:$0xff] %v321
        %324 = vst [vmem:[#allocation2 - $0x7] sm:$0x80] %v304
        %s325 = sand.u32 %s102, 1
        %s326 = scalar_lea.sflag [#allocation5], %s325
        %s327 = sand.u32 %s102, 1
        %s328 = smul.addr %s327, 16
        %s329 = scalar_lea.vmem [#allocation8], %s328
        // Predicated region
        $region41: #{tpu_custom_call.1} parent=27 // pred_check
          %p330 = pneg %p112
        $region42: #{tpu_custom_call.1} parent=27 // pred_check_branch
          %332 = sbr.rel (%p330) target = $region44
        $region43: #{tpu_custom_call.1} parent=27 // pred_region
          %s333 = smul.u32 2, %s27
          %s335 = ssub.s32 256, 256
          %336 = vsyncadd %s326, %s335
          %s337 = sadd.s32 %s26, %s333
          %s338 = smul.addr %s25, 2
          %s339 = sadd.s32 %s337, %s338
          %s340 = smul.addr %s339, 128
          %s341 = scalar_lea.hbm %s2, %s340
          %s342 = sshll.u32 %s329, 4
          %s343 = int_to_ptr.vmem [resolvable:$true] %s342
          %348 = dma.vmem_to_hbm [thread:$0]  %s343, 256, %s341, %s326, 128, 128, 8
        $region44: #{tpu_custom_call.1} parent=27 // pred_fallthru
          _
      $region28: #{tpu_custom_call.1} parent=5 // pred_fallthru
        _
      %p349 = scmp.le.s32.totalorder 2, %s15
      // Predicated region
      $region45: #{tpu_custom_call.1} parent=5 // pred_check
        %p350 = pneg %p349
      $region46: #{tpu_custom_call.1} parent=5 // pred_check_branch
        %352 = sbr.rel (%p350) target = $region48
      $region47: #{tpu_custom_call.1} parent=5 // pred_region
        %s353 = ssub.s32 %s15, 2
        // Predicated region
        $region49: #{tpu_custom_call.1} parent=47 // pred_check
          %p354 = pneg %p118
        $region50: #{tpu_custom_call.1} parent=47 // pred_check_branch
          %356 = sbr.rel (%p354) target = $region52
        $region51: #{tpu_custom_call.1} parent=47 // pred_region
          %s357 = sand.u32 %s103, 1
          %s358 = scalar_lea.sflag [#allocation5], %s357
          %s359 = sand.u32 %s103, 1
          %s360 = smul.addr %s359, 16
          %s361 = scalar_lea.vmem [#allocation8], %s360
          %362 = dma.done %s358, 256
        $region52: #{tpu_custom_call.1} parent=47 // pred_fallthru
          _
      $region48: #{tpu_custom_call.1} parent=5 // pred_fallthru
        _
    $region6: #{tpu_custom_call.1} parent=1 // loop_footer
      %s19 = sadd.s32 1, %s15
    $region7: #{tpu_custom_call.1} parent=1 // loop_footer_branch
      %14 = sbr.rel target = $region3
    $region8: #{tpu_custom_call.1} parent=1 // loop_exit
      _
    %363 = vsyncpa [#allocation4], 1
    %s364 = scalar_lea.sflag [#allocation4], 1
    %365 = vsyncpa %s364, 1
    %366 = vsyncpa [#allocation7], 1
    %367 = vsyncpa [#allocation5], 1
    %s368 = scalar_lea.sflag [#allocation5], 1
    %369 = vsyncpa %s368, 1

</llo_original>
